<compile_context>
chip_gen: v6e
topology: v6e:2x2x1
jax: 0.10.0
libtpu: 0.0.40
codegen_flags: <defaults>
</compile_context>

<pallas_src>
import jax
import jax.numpy as jnp
from jax.experimental import pallas as pl
from jax.experimental.pallas import tpu as pltpu


def _dma_identity_kernel(x_hbm_ref, o_hbm_ref, copy_sem):
    # Single HBM->HBM DMA of the whole array: no VMEM staging, no grid,
    # no vector load/store traffic.  The DMA engine runs at full HBM BW.
    cp = pltpu.make_async_copy(x_hbm_ref, o_hbm_ref, copy_sem)
    cp.start()
    cp.wait()


def _pallas_identity_copy(x: jnp.ndarray) -> jnp.ndarray:
    """Materialize a fresh copy of `x` via one HBM->HBM DMA (no grid)."""
    if x.size == 0:
        # Degenerate shapes would produce an empty DMA; just return as-is.
        return x
    nbytes = x.size * x.dtype.itemsize
    return pl.pallas_call(
        _dma_identity_kernel,
        out_shape=jax.ShapeDtypeStruct(x.shape, x.dtype),
        # Keep both operands in HBM; the kernel body drives the DMA itself.
        in_specs=[pl.BlockSpec(memory_space=pl.ANY)],
        out_specs=pl.BlockSpec(memory_space=pl.ANY),
        scratch_shapes=[pltpu.SemaphoreType.DMA(())],
        cost_estimate=pl.CostEstimate(
            flops=0, transcendentals=0, bytes_accessed=2 * nbytes
        ),
        compiler_params=pltpu.CompilerParams(has_side_effects=True),
    )(x)


def transform_forward(
    x: jnp.ndarray,
    in_features: int,
    out_features: int,
    *,
    materialize_copy: bool = False,
) -> jnp.ndarray:
    """Forward of the base Transform (identity pass-through).

    x: (..., in_features) -> (..., out_features), with in_features == out_features.

    By default the identity is short-circuited at the JAX level (return x);
    set materialize_copy=True to force a fresh output buffer via a single
    HBM->HBM DMA Pallas kernel (placeholder hook for real subclasses).
    """
    assert x.ndim >= 1 and x.shape[-1] == in_features
    assert in_features == out_features, (
        "Base Transform has no parameterized mapping; identity requires "
        "in_features == out_features."
    )
    if not materialize_copy:
        # Highest-value optimization: identity needs no kernel at all.
        return x
    return _pallas_identity_copy(x)


class TransformPallas:
    """JAX/Pallas mirror of mlcolvar.core.transform.Transform (base class)."""

    def __init__(self, in_features: int, out_features: int):
        self.in_features = in_features
        self.out_features = out_features

    def setup_from_datamodule(self, datamodule):
        pass

    def forward(self, X: jnp.ndarray, *, materialize_copy: bool = False) -> jnp.ndarray:
        return transform_forward(
            X, self.in_features, self.out_features, materialize_copy=materialize_copy
        )

    def teardown(self):
        pass


if __name__ == "__main__":
    key = jax.random.PRNGKey(0)
    batch, in_features, out_features = 8, 32, 32

    x = jax.random.normal(key, (batch, in_features), dtype=jnp.float32)

    module = TransformPallas(in_features, out_features)

    # Default path: identity short-circuit (no kernel launch).
    y_fast = jax.block_until_ready(module.forward(x))
    assert y_fast.shape == (batch, out_features)
    assert jnp.allclose(y_fast, x)

    # Pallas path: single HBM->HBM DMA copy (placeholder hook for subclasses).
    y_copy = jax.block_until_ready(module.forward(x, materialize_copy=True))
    assert y_copy.shape == (batch, out_features)
    assert jnp.allclose(y_copy, x)

    print("KERNEL_OK")
</pallas_src>

<mosaic_0001>
module attributes {stable_mosaic.version = 11 : i64} {
  func.func @_dma_identity_kernel(%arg0: memref<8x32xf32, #tpu.memory_space<any>>, %arg1: memref<8x32xf32, #tpu.memory_space<any>>, %arg2: memref<!tpu.dma_semaphore, #tpu.memory_space<semaphore_mem>>) attributes {dimension_semantics = [], scalar_prefetch = 0 : i64, scratch_operands = 1 : i64, tpu.core_type = #tpu.core_type<tc>} {
    tpu.enqueue_dma source(%arg0 : memref<8x32xf32, #tpu.memory_space<any>>) target(%arg1 : memref<8x32xf32, #tpu.memory_space<any>>) target_semaphore(%arg2 : memref<!tpu.dma_semaphore, #tpu.memory_space<semaphore_mem>>)
    tpu.wait_dma2 semaphore(%arg2 : memref<!tpu.dma_semaphore, #tpu.memory_space<semaphore_mem>>) src(%arg0 : memref<8x32xf32, #tpu.memory_space<any>>) dst(%arg1 : memref<8x32xf32, #tpu.memory_space<any>>)
    return
  }
}

</mosaic_0001>

<llo_original>
// kernel: tpu_custom_call.1
$region0: #{tpu_custom_call.1}
  #allocation0 [shape = 'u32[]', space=smem, size = 0x4, offset = 0x4, fixed_abs, tag = 'smem constant byte address 0x4 - core index']
  #allocation1 [shape = 'u32[144,128]{1,0:T(1,128)}', space=vmem, size = 0x12000, scoped, tag = 'internal scratch']
  #allocation2 [shape = 's32[1]{0}', space=sflag, size = 0x4, scoped, tag = 'scratch operand']
  #allocation3 [shape = 's32[]', space=sflag, size = 0x4, offset = 0, fixed_abs, tag = 'sflag constant byte address 0x0 - dummy sync flag']
  #allocation4 [shape = 'u32[0]{0}', space=smem, size = 0, offset = 0, fixed_abs, tag = 'smem constant byte address 0x0 - null']
  %s0 = inlined_call_operand.hbm [shape: f32[8,32], index: 0, kind: input, shape index: {}]
  %s1 = inlined_call_operand.hbm [shape: f32[8,32], index: 1, kind: output, shape index: {}]
  %s2 = sld [smem:[#allocation0]]
  $region2: #{tpu_custom_call.1} parent=0
    _
  %s4 = ssub.s32 1, %s2
  %s5 = scalar_select 0, %s4, %s2
  %s7 = sshll.u32 1, 14
  %s8 = sxor.u32 4294967295, %s7
  %12 = dma.general %s0, 128, %s1, [#allocation2], 131072, [#allocation4], 0, 0
  %s13 = smul.u32 8, 1
  %s14 = sshll.u32 %s13, 4
  %15 = dma.done [#allocation2], %s14
  %16 = vsyncmov [#allocation2]
  %s17 = vpop.sfrf %16
  %p18 = scmp.eq.s32.totalorder %s17, 0
  %p19 = pneg %p18
  %21 = shalt.err (%p19)

</llo_original>
